<compile_context>
chip_gen: v7x
topology: tpu7x:2x2x1
jax: 0.10.0
libtpu: 0.0.40
codegen_flags: <defaults>
</compile_context>

<pallas_src>
import functools

import jax
import jax.numpy as jnp
from jax import lax
from jax.experimental import pallas as pl
from jax.experimental.pallas import tpu as pltpu


_ROLL_OK_CACHE = None


def _sublane_roll_ok():
    """Probe: static pltpu.roll along the sublane axis lowers and matches jnp.roll."""
    global _ROLL_OK_CACHE
    if _ROLL_OK_CACHE is None:
        def probe(x_ref, o_ref):
            x = x_ref[...]
            o_ref[...] = (pltpu.roll(x, 1, 0) + pltpu.roll(x, 8, 0)
                          + pltpu.roll(x, 9, 0))
        try:
            x = jnp.arange(256 * 128, dtype=jnp.float32).reshape(256, 128)
            got = pl.pallas_call(
                probe, out_shape=jax.ShapeDtypeStruct((256, 128), jnp.float32))(x)
            want = jnp.roll(x, 1, 0) + jnp.roll(x, 8, 0) + jnp.roll(x, 9, 0)
            _ROLL_OK_CACHE = bool(jnp.array_equal(got, want))
        except Exception:  # lowering unsupported -> use compare-based fallback
            _ROLL_OK_CACHE = False
    return _ROLL_OK_CACHE


def _grid_sample_kernel(grid_ref, x_ref, out_ref, *, H, W, Wo, HW, P_tile,
                        grid_scale, grid_zp, use_roll):
    # grid_ref: (2, P_tile) int32  -- rows = (dx_int, dy_int) for this pixel tile
    # x_ref:    (C, HW)     int8   -- resident across the pixel-tile grid axis
    # out_ref:  (C, P_tile) int8
    t = pl.program_id(1)

    g = grid_ref[...].astype(jnp.float32)                        # (2, P_tile)
    dx = (g[0:1, :] - grid_zp) * grid_scale                      # (1, P_tile)
    dy = (g[1:2, :] - grid_zp) * grid_scale

    # Global output pixel coordinates for this tile (row-major Ho x Wo).
    p = (t * P_tile
         + lax.broadcasted_iota(jnp.int32, (1, P_tile), 1)).astype(jnp.float32)
    oy = jnp.floor((p + 0.5) / float(Wo))                        # exact for p < 2^23
    ox = p - oy * float(Wo)

    sx = ox + dx                                                 # absolute src x (pixels)
    sy = oy + dy                                                 # absolute src y (pixels)

    x0 = jnp.floor(sx)
    y0 = jnp.floor(sy)
    fx = sx - x0
    fy = sy - y0
    x0i = x0.astype(jnp.int32)
    y0i = y0.astype(jnp.int32)

    def valid(cx, cy):
        return ((cx >= 0) & (cx < W) & (cy >= 0) & (cy < H)).astype(jnp.float32)

    # Per-corner bilinear weights with zeros-padding validity folded in.
    w00 = (1.0 - fx) * (1.0 - fy) * valid(x0i,     y0i)
    w10 = fx         * (1.0 - fy) * valid(x0i + 1, y0i)
    w01 = (1.0 - fx) * fy         * valid(x0i,     y0i + 1)
    w11 = fx         * fy         * valid(x0i + 1, y0i + 1)

    hw_iota = lax.broadcasted_iota(jnp.int32, (HW, P_tile), 0)

    if use_roll:
        # One one-hot (kept in f32: 32-bit layout keeps the sublane rotate
        # cheap); the other three corners are XLU rolls by +1 / +W / +W+1 in
        # flat-index space.  Clamp+wrap puts the base index in [0, HW)
        # whenever ANY corner is in-bounds; fully-OOB points have all-zero
        # weights so their (arbitrary) base position is irrelevant, and
        # wrap-around aliases are killed by weight*valid == 0.
        x0c = jnp.clip(x0i, -1, W - 1)
        y0c = jnp.clip(y0i, -1, H - 1)
        base = y0c * W + x0c
        base = jnp.where(base < 0, base + HW, base)              # (1, P_tile)
        onehot = (hw_iota == base).astype(jnp.float32)           # (HW, P_tile)
        wmat = (onehot * w00
                + pltpu.roll(onehot, 1, 0) * w10
                + pltpu.roll(onehot, W, 0) * w01
                + pltpu.roll(onehot, W + 1, 0) * w11)
    else:
        # Fallback: four compares against the true per-corner flat indices.
        # Negative / >= HW indices match nothing (and have zero weight anyway).
        i00 = y0i * W + x0i
        wmat = (jnp.where(hw_iota == i00, w00, 0.0)
                + jnp.where(hw_iota == i00 + 1, w10, 0.0)
                + jnp.where(hw_iota == i00 + W, w01, 0.0)
                + jnp.where(hw_iota == i00 + W + 1, w11, 0.0))

    # bf16 MXU matmul: int8 values are exact in bf16, bilinear-weight rounding
    # error is <= 0.25 LSB of the int8 output; accumulate in f32.
    x_bf16 = x_ref[...].astype(jnp.float32).astype(jnp.bfloat16)  # (C, HW)
    acc = jnp.dot(x_bf16, wmat.astype(jnp.bfloat16),
                  preferred_element_type=jnp.float32)             # (C, P_tile)

    # Requantize with the input scale (out_dtype = qint8).
    q = jnp.clip(jnp.floor(acc + 0.5), -128.0, 127.0)
    out_ref[...] = q.astype(jnp.int8)


def _choose_p_tile(HW, P, budget_bytes=16 * 1024 * 1024):
    """Largest pixel tile (multiple of 128) s.t. ~5 (HW, P_tile) f32 temps fit budget."""
    cap = budget_bytes // (5 * 4 * HW)
    cap = max(128, (cap // 128) * 128)
    p_pad_min = ((P + 127) // 128) * 128      # lane-dense output (>= 128 lanes)
    return min(cap, p_pad_min)


def grid_sample_quantized(x_int8, grid_int, grid_scale, grid_zero_point):
    """Quantized GridSample: returns int8 output [N, C, H_out, W_out]."""
    N, C, H, W = x_int8.shape
    _, Ho, Wo, _ = grid_int.shape
    HW = H * W
    P = Ho * Wo

    P_tile = _choose_p_tile(HW, P)
    n_tiles = pl.cdiv(P, P_tile)
    P_pad = n_tiles * P_tile

    # Lane-dense layout plumbing (outside the kernel): flatten spatial dims and
    # put the long pixel axis last everywhere.
    x_flat = x_int8.reshape(N, C, HW)
    grid_t = jnp.transpose(grid_int.astype(jnp.int32), (0, 3, 1, 2)).reshape(N, 2, P)
    if P_pad != P:
        grid_t = jnp.pad(grid_t, ((0, 0), (0, 0), (0, P_pad - P)))

    kernel = functools.partial(
        _grid_sample_kernel, H=H, W=W, Wo=Wo, HW=HW, P_tile=P_tile,
        grid_scale=float(grid_scale), grid_zp=float(grid_zero_point),
        use_roll=_sublane_roll_ok())

    out_flat = pl.pallas_call(
        kernel,
        out_shape=jax.ShapeDtypeStruct((N, C, P_pad), jnp.int8),
        grid_spec=pltpu.PrefetchScalarGridSpec(
            num_scalar_prefetch=0,
            grid=(N, n_tiles),
            in_specs=[
                pl.BlockSpec((pl.Squeezed(), 2, P_tile), lambda n, t: (n, 0, t)),
                # Same x block for every pixel tile -> stays resident in VMEM
                # across the inner grid axis (fetched once per batch element).
                pl.BlockSpec((pl.Squeezed(), C, HW), lambda n, t: (n, 0, 0)),
            ],
            out_specs=pl.BlockSpec((pl.Squeezed(), C, P_tile),
                                   lambda n, t: (n, 0, t)),
        ),
        compiler_params=pltpu.CompilerParams(
            dimension_semantics=("parallel", "parallel"),
            vmem_limit_bytes=32 * 1024 * 1024),
    )(grid_t, x_flat)

    return out_flat[:, :, :P].reshape(N, C, Ho, Wo)


def _reference(x_int8, grid_int, grid_scale, grid_zp):
    """Pure-JAX reference of the same semantics (for a sanity check)."""
    N, C, H, W = x_int8.shape
    _, Ho, Wo, _ = grid_int.shape
    x = x_int8.astype(jnp.float32)
    g = grid_int.astype(jnp.float32)
    dx = (g[..., 0] - grid_zp) * grid_scale
    dy = (g[..., 1] - grid_zp) * grid_scale
    ox = jnp.arange(Wo, dtype=jnp.float32)[None, None, :]
    oy = jnp.arange(Ho, dtype=jnp.float32)[None, :, None]
    sx = ox + dx
    sy = oy + dy
    x0 = jnp.floor(sx); y0 = jnp.floor(sy)
    x1 = x0 + 1.0;      y1 = y0 + 1.0
    wx1 = sx - x0; wx0 = 1.0 - wx1
    wy1 = sy - y0; wy0 = 1.0 - wy1

    def gather(cx, cy):
        valid = ((cx >= 0) & (cx < W) & (cy >= 0) & (cy < H)).astype(jnp.float32)
        cxi = jnp.clip(cx, 0, W - 1).astype(jnp.int32)
        cyi = jnp.clip(cy, 0, H - 1).astype(jnp.int32)
        v = jax.vmap(lambda xn, yn, xn_idx: xn[:, yn, xn_idx])(x, cyi, cxi)
        return v * valid[:, None, :, :]

    out = (gather(x0, y0) * (wx0 * wy0)[:, None]
           + gather(x1, y0) * (wx1 * wy0)[:, None]
           + gather(x0, y1) * (wx0 * wy1)[:, None]
           + gather(x1, y1) * (wx1 * wy1)[:, None])
    return jnp.clip(jnp.floor(out + 0.5), -128.0, 127.0).astype(jnp.int8)


if __name__ == "__main__":
    key = jax.random.PRNGKey(0)
    kx, kg = jax.random.split(key)

    N, C, H, W = 2, 4, 16, 16
    Ho, Wo = 8, 8

    # quantized int representations (synthetic, deterministic)
    x_int8 = jax.random.randint(kx, (N, C, H, W), -128, 128,
                                dtype=jnp.int32).astype(jnp.int8)
    grid_scale = 0.05          # grid.q_scale()
    grid_zero_point = 0        # grid.q_zero_point()
    # grid int_repr; dequantized offsets land roughly in [-4, 4] pixels
    grid_int = jax.random.randint(kg, (N, Ho, Wo, 2), -80, 80, dtype=jnp.int32)

    out = grid_sample_quantized(x_int8, grid_int, grid_scale, grid_zero_point)
    out = jax.block_until_ready(out)

    ref = _reference(x_int8, grid_int, grid_scale, grid_zero_point)

    assert out.shape == (N, C, Ho, Wo) and out.dtype == jnp.int8
    max_diff = int(jnp.max(jnp.abs(out.astype(jnp.int32) - ref.astype(jnp.int32))))
    assert max_diff <= 1, f"mismatch vs reference, max diff = {max_diff}"

    print("KERNEL_OK")
</pallas_src>

<mosaic_0001>
module attributes {stable_mosaic.version = 11 : i64} {
  func.func @probe(%arg0: memref<256x128xf32, #tpu.memory_space<vmem>>, %arg1: memref<256x128xf32, #tpu.memory_space<vmem>>) attributes {dimension_semantics = [], scalar_prefetch = 0 : i64, scratch_operands = 0 : i64, tpu.core_type = #tpu.core_type<tc>} {
    %c0 = arith.constant 0 : index
    %c0_0 = arith.constant 0 : index
    %0 = vector.load %arg0[%c0, %c0_0] : memref<256x128xf32, #tpu.memory_space<vmem>>, vector<256x128xf32>
    %c1_i32 = arith.constant 1 : i32
    %1 = tpu.dynamic_rotate %0 by %c1_i32 dim 0 : vector<256x128xf32>, i32 -> vector<256x128xf32>
    %c8_i32 = arith.constant 8 : i32
    %2 = tpu.dynamic_rotate %0 by %c8_i32 dim 0 : vector<256x128xf32>, i32 -> vector<256x128xf32>
    %3 = arith.addf %1, %2 : vector<256x128xf32>
    %c9_i32 = arith.constant 9 : i32
    %4 = tpu.dynamic_rotate %0 by %c9_i32 dim 0 : vector<256x128xf32>, i32 -> vector<256x128xf32>
    %5 = arith.addf %3, %4 : vector<256x128xf32>
    %c0_1 = arith.constant 0 : index
    %c0_2 = arith.constant 0 : index
    %6 = vector.load %arg1[%c0_1, %c0_2] : memref<256x128xf32, #tpu.memory_space<vmem>>, vector<256x128xf32>
    tpu.vector_store %arg1[%c0_1, %c0_2], %5 {strides = array<i32>} : memref<256x128xf32, #tpu.memory_space<vmem>>, vector<256x128xf32>,
    return
  }
}

module attributes {stable_mosaic.version = 11 : i64} {
  func.func @_grid_sample_kernel(%arg0: i32, %arg1: i32, %arg2: memref<1x2x128xi32, #tpu.memory_space<vmem>>, %arg3: memref<1x4x256xi8, #tpu.memory_space<vmem>>, %arg4: memref<1x4x128xi8, #tpu.memory_space<vmem>>) attributes {dimension_semantics = [#tpu.dimension_semantics<parallel>, #tpu.dimension_semantics<parallel>], iteration_bounds = array<i64: 2, 1>, scalar_prefetch = 0 : i64, scratch_operands = 0 : i64, tpu.core_type = #tpu.core_type<tc>, window_params = [{transform_indices = @transform_0, window_bounds = array<i64: 1, 2, 128>}, {transform_indices = @transform_1, window_bounds = array<i64: 1, 4, 256>}, {transform_indices = @transform_2, window_bounds = array<i64: 1, 4, 128>}]} {
    %c0 = arith.constant 0 : index
    %c0_0 = arith.constant 0 : index
    %c0_1 = arith.constant 0 : index
    %0 = vector.load %arg2[%c0, %c0_0, %c0_1] : memref<1x2x128xi32, #tpu.memory_space<vmem>>, vector<1x2x128xi32>
    %1 = vector.shape_cast %0 : vector<1x2x128xi32> to vector<2x128xi32>
    %2 = arith.sitofp %1 : vector<2x128xi32> to vector<2x128xf32>
    %3 = vector.extract_strided_slice %2 {offsets = [0, 0], sizes = [1, 128], strides = [1, 1]} : vector<2x128xf32> to vector<1x128xf32>
    %cst = arith.constant 0.000000e+00 : f32
    %4 = vector.broadcast %cst : f32 to vector<1x128xf32>
    %5 = arith.subf %3, %4 : vector<1x128xf32>
    %cst_2 = arith.constant 5.000000e-02 : f32
    %6 = vector.broadcast %cst_2 : f32 to vector<1x128xf32>
    %7 = arith.mulf %5, %6 : vector<1x128xf32>
    %8 = vector.extract_strided_slice %2 {offsets = [1, 0], sizes = [1, 128], strides = [1, 1]} : vector<2x128xf32> to vector<1x128xf32>
    %cst_3 = arith.constant 0.000000e+00 : f32
    %9 = vector.broadcast %cst_3 : f32 to vector<1x128xf32>
    %10 = arith.subf %8, %9 : vector<1x128xf32>
    %cst_4 = arith.constant 5.000000e-02 : f32
    %11 = vector.broadcast %cst_4 : f32 to vector<1x128xf32>
    %12 = arith.mulf %10, %11 : vector<1x128xf32>
    %c128_i32 = arith.constant 128 : i32
    %13 = arith.muli %arg1, %c128_i32 : i32
    %14 = tpu.iota {dimensions = array<i32: 1>} : vector<1x128xi32>
    %15 = vector.broadcast %13 : i32 to vector<1x128xi32>
    %16 = arith.addi %15, %14 : vector<1x128xi32>
    %17 = arith.sitofp %16 : vector<1x128xi32> to vector<1x128xf32>
    %cst_5 = arith.constant 5.000000e-01 : f32
    %18 = vector.broadcast %cst_5 : f32 to vector<1x128xf32>
    %19 = arith.addf %17, %18 : vector<1x128xf32>
    %cst_6 = arith.constant 8.000000e+00 : f32
    %20 = vector.broadcast %cst_6 : f32 to vector<1x128xf32>
    %21 = arith.divf %19, %20 : vector<1x128xf32>
    %22 = math.floor %21 : vector<1x128xf32>
    %cst_7 = arith.constant 8.000000e+00 : f32
    %23 = vector.broadcast %cst_7 : f32 to vector<1x128xf32>
    %24 = arith.mulf %22, %23 : vector<1x128xf32>
    %25 = arith.subf %17, %24 : vector<1x128xf32>
    %26 = arith.addf %25, %7 : vector<1x128xf32>
    %27 = arith.addf %22, %12 : vector<1x128xf32>
    %28 = math.floor %26 : vector<1x128xf32>
    %29 = math.floor %27 : vector<1x128xf32>
    %30 = arith.subf %26, %28 : vector<1x128xf32>
    %31 = arith.subf %27, %29 : vector<1x128xf32>
    %32 = arith.fptosi %28 : vector<1x128xf32> to vector<1x128xi32>
    %33 = arith.fptosi %29 : vector<1x128xf32> to vector<1x128xi32>
    %cst_8 = arith.constant 1.000000e+00 : f32
    %34 = vector.broadcast %cst_8 : f32 to vector<1x128xf32>
    %35 = arith.subf %34, %30 : vector<1x128xf32>
    %cst_9 = arith.constant 1.000000e+00 : f32
    %36 = vector.broadcast %cst_9 : f32 to vector<1x128xf32>
    %37 = arith.subf %36, %31 : vector<1x128xf32>
    %38 = arith.mulf %35, %37 : vector<1x128xf32>
    %c0_i32 = arith.constant 0 : i32
    %39 = vector.broadcast %c0_i32 : i32 to vector<1x128xi32>
    %40 = arith.cmpi sge, %32, %39 : vector<1x128xi32>
    %c16_i32 = arith.constant 16 : i32
    %41 = vector.broadcast %c16_i32 : i32 to vector<1x128xi32>
    %42 = arith.cmpi slt, %32, %41 : vector<1x128xi32>
    %43 = arith.andi %40, %42 : vector<1x128xi1>
    %c0_i32_10 = arith.constant 0 : i32
    %44 = vector.broadcast %c0_i32_10 : i32 to vector<1x128xi32>
    %45 = arith.cmpi sge, %33, %44 : vector<1x128xi32>
    %46 = arith.andi %43, %45 : vector<1x128xi1>
    %c16_i32_11 = arith.constant 16 : i32
    %47 = vector.broadcast %c16_i32_11 : i32 to vector<1x128xi32>
    %48 = arith.cmpi slt, %33, %47 : vector<1x128xi32>
    %49 = arith.andi %46, %48 : vector<1x128xi1>
    %50 = arith.extui %49 : vector<1x128xi1> to vector<1x128xi32>
    %51 = arith.sitofp %50 : vector<1x128xi32> to vector<1x128xf32>
    %52 = arith.mulf %38, %51 : vector<1x128xf32>
    %cst_12 = arith.constant 1.000000e+00 : f32
    %53 = vector.broadcast %cst_12 : f32 to vector<1x128xf32>
    %54 = arith.subf %53, %31 : vector<1x128xf32>
    %55 = arith.mulf %30, %54 : vector<1x128xf32>
    %c1_i32 = arith.constant 1 : i32
    %56 = vector.broadcast %c1_i32 : i32 to vector<1x128xi32>
    %57 = arith.addi %32, %56 : vector<1x128xi32>
    %c0_i32_13 = arith.constant 0 : i32
    %58 = vector.broadcast %c0_i32_13 : i32 to vector<1x128xi32>
    %59 = arith.cmpi sge, %57, %58 : vector<1x128xi32>
    %c16_i32_14 = arith.constant 16 : i32
    %60 = vector.broadcast %c16_i32_14 : i32 to vector<1x128xi32>
    %61 = arith.cmpi slt, %57, %60 : vector<1x128xi32>
    %62 = arith.andi %59, %61 : vector<1x128xi1>
    %c0_i32_15 = arith.constant 0 : i32
    %63 = vector.broadcast %c0_i32_15 : i32 to vector<1x128xi32>
    %64 = arith.cmpi sge, %33, %63 : vector<1x128xi32>
    %65 = arith.andi %62, %64 : vector<1x128xi1>
    %c16_i32_16 = arith.constant 16 : i32
    %66 = vector.broadcast %c16_i32_16 : i32 to vector<1x128xi32>
    %67 = arith.cmpi slt, %33, %66 : vector<1x128xi32>
    %68 = arith.andi %65, %67 : vector<1x128xi1>
    %69 = arith.extui %68 : vector<1x128xi1> to vector<1x128xi32>
    %70 = arith.sitofp %69 : vector<1x128xi32> to vector<1x128xf32>
    %71 = arith.mulf %55, %70 : vector<1x128xf32>
    %cst_17 = arith.constant 1.000000e+00 : f32
    %72 = vector.broadcast %cst_17 : f32 to vector<1x128xf32>
    %73 = arith.subf %72, %30 : vector<1x128xf32>
    %74 = arith.mulf %73, %31 : vector<1x128xf32>
    %c1_i32_18 = arith.constant 1 : i32
    %75 = vector.broadcast %c1_i32_18 : i32 to vector<1x128xi32>
    %76 = arith.addi %33, %75 : vector<1x128xi32>
    %c0_i32_19 = arith.constant 0 : i32
    %77 = vector.broadcast %c0_i32_19 : i32 to vector<1x128xi32>
    %78 = arith.cmpi sge, %32, %77 : vector<1x128xi32>
    %c16_i32_20 = arith.constant 16 : i32
    %79 = vector.broadcast %c16_i32_20 : i32 to vector<1x128xi32>
    %80 = arith.cmpi slt, %32, %79 : vector<1x128xi32>
    %81 = arith.andi %78, %80 : vector<1x128xi1>
    %c0_i32_21 = arith.constant 0 : i32
    %82 = vector.broadcast %c0_i32_21 : i32 to vector<1x128xi32>
    %83 = arith.cmpi sge, %76, %82 : vector<1x128xi32>
    %84 = arith.andi %81, %83 : vector<1x128xi1>
    %c16_i32_22 = arith.constant 16 : i32
    %85 = vector.broadcast %c16_i32_22 : i32 to vector<1x128xi32>
    %86 = arith.cmpi slt, %76, %85 : vector<1x128xi32>
    %87 = arith.andi %84, %86 : vector<1x128xi1>
    %88 = arith.extui %87 : vector<1x128xi1> to vector<1x128xi32>
    %89 = arith.sitofp %88 : vector<1x128xi32> to vector<1x128xf32>
    %90 = arith.mulf %74, %89 : vector<1x128xf32>
    %91 = arith.mulf %30, %31 : vector<1x128xf32>
    %c1_i32_23 = arith.constant 1 : i32
    %92 = vector.broadcast %c1_i32_23 : i32 to vector<1x128xi32>
    %93 = arith.addi %32, %92 : vector<1x128xi32>
    %c1_i32_24 = arith.constant 1 : i32
    %94 = vector.broadcast %c1_i32_24 : i32 to vector<1x128xi32>
    %95 = arith.addi %33, %94 : vector<1x128xi32>
    %c0_i32_25 = arith.constant 0 : i32
    %96 = vector.broadcast %c0_i32_25 : i32 to vector<1x128xi32>
    %97 = arith.cmpi sge, %93, %96 : vector<1x128xi32>
    %c16_i32_26 = arith.constant 16 : i32
    %98 = vector.broadcast %c16_i32_26 : i32 to vector<1x128xi32>
    %99 = arith.cmpi slt, %93, %98 : vector<1x128xi32>
    %100 = arith.andi %97, %99 : vector<1x128xi1>
    %c0_i32_27 = arith.constant 0 : i32
    %101 = vector.broadcast %c0_i32_27 : i32 to vector<1x128xi32>
    %102 = arith.cmpi sge, %95, %101 : vector<1x128xi32>
    %103 = arith.andi %100, %102 : vector<1x128xi1>
    %c16_i32_28 = arith.constant 16 : i32
    %104 = vector.broadcast %c16_i32_28 : i32 to vector<1x128xi32>
    %105 = arith.cmpi slt, %95, %104 : vector<1x128xi32>
    %106 = arith.andi %103, %105 : vector<1x128xi1>
    %107 = arith.extui %106 : vector<1x128xi1> to vector<1x128xi32>
    %108 = arith.sitofp %107 : vector<1x128xi32> to vector<1x128xf32>
    %109 = arith.mulf %91, %108 : vector<1x128xf32>
    %110 = tpu.iota {dimensions = array<i32: 0>} : vector<256x128xi32>
    %c16_i32_29 = arith.constant 16 : i32
    %111 = vector.broadcast %c16_i32_29 : i32 to vector<1x128xi32>
    %112 = arith.muli %33, %111 : vector<1x128xi32>
    %113 = arith.addi %112, %32 : vector<1x128xi32>
    %114 = vector.broadcast %113 : vector<1x128xi32> to vector<256x128xi32>
    %115 = arith.cmpi eq, %110, %114 : vector<256x128xi32>
    %cst_30 = arith.constant 0.000000e+00 : f32
    %116 = vector.shape_cast %52 : vector<1x128xf32> to vector<1x128xf32>
    %117 = vector.broadcast %116 : vector<1x128xf32> to vector<256x128xf32>
    %118 = vector.broadcast %cst_30 : f32 to vector<256x128xf32>
    %119 = arith.select %115, %117, %118 : vector<256x128xi1>, vector<256x128xf32>
    %c1_i32_31 = arith.constant 1 : i32
    %120 = vector.broadcast %c1_i32_31 : i32 to vector<1x128xi32>
    %121 = arith.addi %113, %120 : vector<1x128xi32>
    %122 = vector.broadcast %121 : vector<1x128xi32> to vector<256x128xi32>
    %123 = arith.cmpi eq, %110, %122 : vector<256x128xi32>
    %cst_32 = arith.constant 0.000000e+00 : f32
    %124 = vector.shape_cast %71 : vector<1x128xf32> to vector<1x128xf32>
    %125 = vector.broadcast %124 : vector<1x128xf32> to vector<256x128xf32>
    %126 = vector.broadcast %cst_32 : f32 to vector<256x128xf32>
    %127 = arith.select %123, %125, %126 : vector<256x128xi1>, vector<256x128xf32>
    %128 = arith.addf %119, %127 : vector<256x128xf32>
    %c16_i32_33 = arith.constant 16 : i32
    %129 = vector.broadcast %c16_i32_33 : i32 to vector<1x128xi32>
    %130 = arith.addi %113, %129 : vector<1x128xi32>
    %131 = vector.broadcast %130 : vector<1x128xi32> to vector<256x128xi32>
    %132 = arith.cmpi eq, %110, %131 : vector<256x128xi32>
    %cst_34 = arith.constant 0.000000e+00 : f32
    %133 = vector.shape_cast %90 : vector<1x128xf32> to vector<1x128xf32>
    %134 = vector.broadcast %133 : vector<1x128xf32> to vector<256x128xf32>
    %135 = vector.broadcast %cst_34 : f32 to vector<256x128xf32>
    %136 = arith.select %132, %134, %135 : vector<256x128xi1>, vector<256x128xf32>
    %137 = arith.addf %128, %136 : vector<256x128xf32>
    %c16_i32_35 = arith.constant 16 : i32
    %138 = vector.broadcast %c16_i32_35 : i32 to vector<1x128xi32>
    %139 = arith.addi %113, %138 : vector<1x128xi32>
    %c1_i32_36 = arith.constant 1 : i32
    %140 = vector.broadcast %c1_i32_36 : i32 to vector<1x128xi32>
    %141 = arith.addi %139, %140 : vector<1x128xi32>
    %142 = vector.broadcast %141 : vector<1x128xi32> to vector<256x128xi32>
    %143 = arith.cmpi eq, %110, %142 : vector<256x128xi32>
    %cst_37 = arith.constant 0.000000e+00 : f32
    %144 = vector.shape_cast %109 : vector<1x128xf32> to vector<1x128xf32>
    %145 = vector.broadcast %144 : vector<1x128xf32> to vector<256x128xf32>
    %146 = vector.broadcast %cst_37 : f32 to vector<256x128xf32>
    %147 = arith.select %143, %145, %146 : vector<256x128xi1>, vector<256x128xf32>
    %148 = arith.addf %137, %147 : vector<256x128xf32>
    %c0_38 = arith.constant 0 : index
    %c0_39 = arith.constant 0 : index
    %c0_40 = arith.constant 0 : index
    %149 = vector.load %arg3[%c0_38, %c0_39, %c0_40] : memref<1x4x256xi8, #tpu.memory_space<vmem>>, vector<1x4x256xi8>
    %150 = vector.shape_cast %149 : vector<1x4x256xi8> to vector<4x256xi8>
    %151 = arith.sitofp %150 : vector<4x256xi8> to vector<4x256xf32>
    %152 = arith.truncf %151 : vector<4x256xf32> to vector<4x256xbf16>
    %153 = arith.truncf %148 : vector<256x128xf32> to vector<256x128xbf16>
    %cst_41 = arith.constant dense<0.000000e+00> : vector<4x128xf32>
    %154 = tpu.matmul %152, %153, %cst_41 {dimension_numbers = #tpu.dot_dimension_numbers<[1], [0], [0], [1], [0, 0, 1, 1], [], []>} : vector<4x256xbf16>, vector<256x128xbf16>, vector<4x128xf32> -> vector<4x128xf32>
    %cst_42 = arith.constant 5.000000e-01 : f32
    %155 = vector.broadcast %cst_42 : f32 to vector<4x128xf32>
    %156 = arith.addf %154, %155 : vector<4x128xf32>
    %157 = math.floor %156 : vector<4x128xf32>
    %cst_43 = arith.constant -1.280000e+02 : f32
    %cst_44 = arith.constant 1.270000e+02 : f32
    %158 = vector.broadcast %cst_43 : f32 to vector<4x128xf32>
    %159 = arith.maximumf %158, %157 : vector<4x128xf32>
    %160 = vector.broadcast %cst_44 : f32 to vector<4x128xf32>
    %161 = arith.minimumf %160, %159 : vector<4x128xf32>
    %162 = arith.fptosi %161 : vector<4x128xf32> to vector<4x128xi8>
    %c0_45 = arith.constant 0 : index
    %c0_46 = arith.constant 0 : index
    %c0_47 = arith.constant 0 : index
    %163 = vector.load %arg4[%c0_45, %c0_46, %c0_47] : memref<1x4x128xi8, #tpu.memory_space<vmem>>, vector<1x4x128xi8>
    %164 = vector.shape_cast %163 : vector<1x4x128xi8> to vector<4x128xi8>
    %165 = vector.shape_cast %162 : vector<4x128xi8> to vector<1x4x128xi8>
    tpu.vector_store %arg4[%c0_45, %c0_46, %c0_47], %165 {strides = array<i32>} : memref<1x4x128xi8, #tpu.memory_space<vmem>>, vector<1x4x128xi8>,
    return
  }
  func.func @transform_0(%arg0: i32, %arg1: i32) -> (i32, i32, i32) {
    %c0_i32 = arith.constant 0 : i32
    %c0_i32_0 = arith.constant 0 : i32
    return %arg0, %c0_i32, %arg1 : i32, i32, i32
  }
  func.func @transform_1(%arg0: i32, %arg1: i32) -> (i32, i32, i32) {
    %c0_i32 = arith.constant 0 : i32
    %c0_i32_0 = arith.constant 0 : i32
    %c0_i32_1 = arith.constant 0 : i32
    return %arg0, %c0_i32, %c0_i32_0 : i32, i32, i32
  }
  func.func @transform_2(%arg0: i32, %arg1: i32) -> (i32, i32, i32) {
    %c0_i32 = arith.constant 0 : i32
    %c0_i32_0 = arith.constant 0 : i32
    return %arg0, %c0_i32, %arg1 : i32, i32, i32
  }
}

</mosaic_0001>

<llo_original>
// kernel: tpu_custom_call.1
$region0: #{tpu_custom_call.1}
  #allocation0 [shape = 'u32[]', space=smem, size = 0x4, offset = 0x4, fixed_abs, tag = 'smem constant byte address 0x4 - core index']
  #allocation1 [shape = 'u32[144,128]{1,0:T(1,128)}', space=vmem, size = 0x12000, scoped, tag = 'internal scratch']
  %s0 = inlined_call_operand.hbm [shape: f32[256,128], index: 0, kind: input, shape index: {}]
  %s1 = inlined_call_operand.hbm [shape: f32[256,128], index: 1, kind: output, shape index: {}]
  %s2 = sld [smem:[#allocation0]]
  $region18: #{tpu_custom_call.1} parent=0
    _
  %s4 = ssub.s32 1, %s2
  %s5 = scalar_select 0, %s4, %s2
  $region1: #{tpu_custom_call.1} parent=0
    #allocation2 [shape = 'u8[131072]{0}', space=vmem, size = 0x20000, scoped, tag = 'input window, operand 0, single buffered']
    #allocation3 [shape = 's32[1]{0}', space=sflag, size = 0x4, scoped, tag = 'scoped memory for tpu_custom_call.1']
    #allocation4 [shape = 's32[1]{0}', space=sflag, size = 0x4, scoped, tag = 'scoped memory for tpu_custom_call.1']
    #allocation5 [shape = 'u8[131072]{0}', space=vmem, size = 0x20000, scoped, tag = 'output window, operand 0, single buffered']
    %6 = vsyncpa [#allocation3], 0
    %7 = vsyncpa [#allocation4], 0
    // Predicated region
    $region2: #{tpu_custom_call.1} parent=1 // pred_check
      _
    $region3: #{tpu_custom_call.1} parent=1 // pred_check_branch
      %9 = sbr.rel (0) target = $region5
    $region4: #{tpu_custom_call.1} parent=1 // pred_region
      %s11 = ssub.s32 4096, 4096
      %12 = vsyncadd [#allocation3], %s11
      %s13 = sshll.u32 [#allocation2], 4
      %s14 = int_to_ptr.vmem [resolvable:$true] %s13
      %19 = dma.hbm_to_vmem [thread:$0]  %s0, 4096, %s14, [#allocation3], 128, 128, 8
    $region5: #{tpu_custom_call.1} parent=1 // pred_fallthru
      _
    // Predicated region
    $region6: #{tpu_custom_call.1} parent=1 // pred_check
      _
    $region7: #{tpu_custom_call.1} parent=1 // pred_check_branch
      %21 = sbr.rel (0) target = $region9
    $region8: #{tpu_custom_call.1} parent=1 // pred_region
      %22 = dma.done [#allocation3], 4096
    $region9: #{tpu_custom_call.1} parent=1 // pred_fallthru
      _
    %v23 = vld [vmem:[#allocation2] sm:$0xff]
    %v24 = vld [vmem:[#allocation2 + $0x8] sm:$0xff]
    %v25 = vld [vmem:[#allocation2 + $0x10] sm:$0xff]
    %v26 = vld [vmem:[#allocation2 + $0x18] sm:$0xff]
    %v27 = vld [vmem:[#allocation2 + $0x20] sm:$0xff]
    %v28 = vld [vmem:[#allocation2 + $0x28] sm:$0xff]
    %v29 = vld [vmem:[#allocation2 + $0x30] sm:$0xff]
    %v30 = vld [vmem:[#allocation2 + $0x38] sm:$0xff]
    %v31 = vld [vmem:[#allocation2 + $0x40] sm:$0xff]
    %v32 = vld [vmem:[#allocation2 + $0x48] sm:$0xff]
    %v33 = vld [vmem:[#allocation2 + $0x50] sm:$0xff]
    %v34 = vld [vmem:[#allocation2 + $0x58] sm:$0xff]
    %v35 = vld [vmem:[#allocation2 + $0x60] sm:$0xff]
    %v36 = vld [vmem:[#allocation2 + $0x68] sm:$0xff]
    %v37 = vld [vmem:[#allocation2 + $0x70] sm:$0xff]
    %v38 = vld [vmem:[#allocation2 + $0x78] sm:$0xff]
    %v39 = vld [vmem:[#allocation2 + $0x80] sm:$0xff]
    %v40 = vld [vmem:[#allocation2 + $0x88] sm:$0xff]
    %v41 = vld [vmem:[#allocation2 + $0x90] sm:$0xff]
    %v42 = vld [vmem:[#allocation2 + $0x98] sm:$0xff]
    %v43 = vld [vmem:[#allocation2 + $0xa0] sm:$0xff]
    %v44 = vld [vmem:[#allocation2 + $0xa8] sm:$0xff]
    %v45 = vld [vmem:[#allocation2 + $0xb0] sm:$0xff]
    %v46 = vld [vmem:[#allocation2 + $0xb8] sm:$0xff]
    %v47 = vld [vmem:[#allocation2 + $0xc0] sm:$0xff]
    %v48 = vld [vmem:[#allocation2 + $0xc8] sm:$0xff]
    %v49 = vld [vmem:[#allocation2 + $0xd0] sm:$0xff]
    %v50 = vld [vmem:[#allocation2 + $0xd8] sm:$0xff]
    %v51 = vld [vmem:[#allocation2 + $0xe0] sm:$0xff]
    %v52 = vld [vmem:[#allocation2 + $0xe8] sm:$0xff]
    %v53 = vld [vmem:[#allocation2 + $0xf0] sm:$0xff]
    %v54 = vld [vmem:[#allocation2 + $0xf8] sm:$0xff]
    %v55 = vrot.slane %v23, 7
    %v56 = vrot.slane %v24, 7
    %v57 = vrot.slane %v25, 7
    %v58 = vrot.slane %v26, 7
    %v59 = vrot.slane %v27, 7
    %v60 = vrot.slane %v28, 7
    %v61 = vrot.slane %v29, 7
    %v62 = vrot.slane %v30, 7
    %v63 = vrot.slane %v31, 7
    %v64 = vrot.slane %v32, 7
    %v65 = vrot.slane %v33, 7
    %v66 = vrot.slane %v34, 7
    %v67 = vrot.slane %v35, 7
    %v68 = vrot.slane %v36, 7
    %v69 = vrot.slane %v37, 7
    %v70 = vrot.slane %v38, 7
    %v71 = vrot.slane %v39, 7
    %v72 = vrot.slane %v40, 7
    %v73 = vrot.slane %v41, 7
    %v74 = vrot.slane %v42, 7
    %v75 = vrot.slane %v43, 7
    %v76 = vrot.slane %v44, 7
    %v77 = vrot.slane %v45, 7
    %v78 = vrot.slane %v46, 7
    %v79 = vrot.slane %v47, 7
    %v80 = vrot.slane %v48, 7
    %v81 = vrot.slane %v49, 7
    %v82 = vrot.slane %v50, 7
    %v83 = vrot.slane %v51, 7
    %v84 = vrot.slane %v52, 7
    %v85 = vrot.slane %v53, 7
    %v86 = vrot.slane %v54, 7
    %v87 = vlaneseq
    %v88 = vshrl.u32 %v87, 7
    %vm89 = vcmp.lt.s32.totalorder %v88, 1
    %v90 = vsel %vm89, %v85, %v86
    %v91 = vsel %vm89, %v84, %v85
    %v92 = vsel %vm89, %v83, %v84
    %v93 = vsel %vm89, %v82, %v83
    %v94 = vsel %vm89, %v81, %v82
    %v95 = vsel %vm89, %v80, %v81
    %v96 = vsel %vm89, %v79, %v80
    %v97 = vsel %vm89, %v78, %v79
    %v98 = vsel %vm89, %v77, %v78
    %v99 = vsel %vm89, %v76, %v77
    %v100 = vsel %vm89, %v75, %v76
    %v101 = vsel %vm89, %v74, %v75
    %v102 = vsel %vm89, %v73, %v74
    %v103 = vsel %vm89, %v72, %v73
    %v104 = vsel %vm89, %v71, %v72
    %v105 = vsel %vm89, %v70, %v71
    %v106 = vsel %vm89, %v69, %v70
    %v107 = vsel %vm89, %v68, %v69
    %v108 = vsel %vm89, %v67, %v68
    %v109 = vsel %vm89, %v66, %v67
    %v110 = vsel %vm89, %v65, %v66
    %v111 = vsel %vm89, %v64, %v65
    %v112 = vsel %vm89, %v63, %v64
    %v113 = vsel %vm89, %v62, %v63
    %v114 = vsel %vm89, %v61, %v62
    %v115 = vsel %vm89, %v60, %v61
    %v116 = vsel %vm89, %v59, %v60
    %v117 = vsel %vm89, %v58, %v59
    %v118 = vsel %vm89, %v57, %v58
    %v119 = vsel %vm89, %v56, %v57
    %v120 = vsel %vm89, %v55, %v56
    %v121 = vsel %vm89, %v86, %v55
    %v122 = vadd.f32 %v121, %v54
    %v123 = vadd.f32 %v120, %v23
    %v124 = vadd.f32 %v119, %v24
    %v125 = vadd.f32 %v118, %v25
    %v126 = vadd.f32 %v117, %v26
    %v127 = vadd.f32 %v116, %v27
    %v128 = vadd.f32 %v115, %v28
    %v129 = vadd.f32 %v114, %v29
    %v130 = vadd.f32 %v113, %v30
    %v131 = vadd.f32 %v112, %v31
    %v132 = vadd.f32 %v111, %v32
    %v133 = vadd.f32 %v110, %v33
    %v134 = vadd.f32 %v109, %v34
    %v135 = vadd.f32 %v108, %v35
    %v136 = vadd.f32 %v107, %v36
    %v137 = vadd.f32 %v106, %v37
    %v138 = vadd.f32 %v105, %v38
    %v139 = vadd.f32 %v104, %v39
    %v140 = vadd.f32 %v103, %v40
    %v141 = vadd.f32 %v102, %v41
    %v142 = vadd.f32 %v101, %v42
    %v143 = vadd.f32 %v100, %v43
    %v144 = vadd.f32 %v99, %v44
    %v145 = vadd.f32 %v98, %v45
    %v146 = vadd.f32 %v97, %v46
    %v147 = vadd.f32 %v96, %v47
    %v148 = vadd.f32 %v95, %v48
    %v149 = vadd.f32 %v94, %v49
    %v150 = vadd.f32 %v93, %v50
    %v151 = vadd.f32 %v92, %v51
    %v152 = vadd.f32 %v91, %v52
    %v153 = vadd.f32 %v90, %v53
    %v154 = vadd.f32 %v122, %v90
    %v155 = vadd.f32 %v123, %v121
    %v156 = vadd.f32 %v124, %v120
    %v157 = vadd.f32 %v125, %v119
    %v158 = vadd.f32 %v126, %v118
    %v159 = vadd.f32 %v127, %v117
    %v160 = vadd.f32 %v128, %v116
    %v161 = vadd.f32 %v129, %v115
    %v162 = vadd.f32 %v130, %v114
    %v163 = vadd.f32 %v131, %v113
    %v164 = vadd.f32 %v132, %v112
    %v165 = vadd.f32 %v133, %v111
    %v166 = vadd.f32 %v134, %v110
    %v167 = vadd.f32 %v135, %v109
    %v168 = vadd.f32 %v136, %v108
    %v169 = vadd.f32 %v137, %v107
    %v170 = vadd.f32 %v138, %v106
    %v171 = vadd.f32 %v139, %v105
    %v172 = vadd.f32 %v140, %v104
    %v173 = vadd.f32 %v141, %v103
    %v174 = vadd.f32 %v142, %v102
    %v175 = vadd.f32 %v143, %v101
    %v176 = vadd.f32 %v144, %v100
    %v177 = vadd.f32 %v145, %v99
    %v178 = vadd.f32 %v146, %v98
    %v179 = vadd.f32 %v147, %v97
    %v180 = vadd.f32 %v148, %v96
    %v181 = vadd.f32 %v149, %v95
    %v182 = vadd.f32 %v150, %v94
    %v183 = vadd.f32 %v151, %v93
    %v184 = vadd.f32 %v152, %v92
    %v185 = vadd.f32 %v153, %v91
    %186 = vst [vmem:[#allocation5] sm:$0xff] %v154
    %187 = vst [vmem:[#allocation5 + $0x8] sm:$0xff] %v155
    %188 = vst [vmem:[#allocation5 + $0x10] sm:$0xff] %v156
    %189 = vst [vmem:[#allocation5 + $0x18] sm:$0xff] %v157
    %190 = vst [vmem:[#allocation5 + $0x20] sm:$0xff] %v158
    %191 = vst [vmem:[#allocation5 + $0x28] sm:$0xff] %v159
    %192 = vst [vmem:[#allocation5 + $0x30] sm:$0xff] %v160
    %193 = vst [vmem:[#allocation5 + $0x38] sm:$0xff] %v161
    %194 = vst [vmem:[#allocation5 + $0x40] sm:$0xff] %v162
    %195 = vst [vmem:[#allocation5 + $0x48] sm:$0xff] %v163
    %196 = vst [vmem:[#allocation5 + $0x50] sm:$0xff] %v164
    %197 = vst [vmem:[#allocation5 + $0x58] sm:$0xff] %v165
    %198 = vst [vmem:[#allocation5 + $0x60] sm:$0xff] %v166
    %199 = vst [vmem:[#allocation5 + $0x68] sm:$0xff] %v167
    %200 = vst [vmem:[#allocation5 + $0x70] sm:$0xff] %v168
    %201 = vst [vmem:[#allocation5 + $0x78] sm:$0xff] %v169
    %202 = vst [vmem:[#allocation5 + $0x80] sm:$0xff] %v170
    %203 = vst [vmem:[#allocation5 + $0x88] sm:$0xff] %v171
    %204 = vst [vmem:[#allocation5 + $0x90] sm:$0xff] %v172
    %205 = vst [vmem:[#allocation5 + $0x98] sm:$0xff] %v173
    %206 = vst [vmem:[#allocation5 + $0xa0] sm:$0xff] %v174
    %207 = vst [vmem:[#allocation5 + $0xa8] sm:$0xff] %v175
    %208 = vst [vmem:[#allocation5 + $0xb0] sm:$0xff] %v176
    %209 = vst [vmem:[#allocation5 + $0xb8] sm:$0xff] %v177
    %210 = vst [vmem:[#allocation5 + $0xc0] sm:$0xff] %v178
    %211 = vst [vmem:[#allocation5 + $0xc8] sm:$0xff] %v179
    %212 = vst [vmem:[#allocation5 + $0xd0] sm:$0xff] %v180
    %213 = vst [vmem:[#allocation5 + $0xd8] sm:$0xff] %v181
    %214 = vst [vmem:[#allocation5 + $0xe0] sm:$0xff] %v182
    %215 = vst [vmem:[#allocation5 + $0xe8] sm:$0xff] %v183
    %216 = vst [vmem:[#allocation5 + $0xf0] sm:$0xff] %v184
    %217 = vst [vmem:[#allocation5 + $0xf8] sm:$0xff] %v185
    // Predicated region
    $region10: #{tpu_custom_call.1} parent=1 // pred_check
      _
    $region11: #{tpu_custom_call.1} parent=1 // pred_check_branch
      %219 = sbr.rel (0) target = $region13
    $region12: #{tpu_custom_call.1} parent=1 // pred_region
      %s221 = ssub.s32 4096, 4096
      %222 = vsyncadd [#allocation4], %s221
      %s223 = sshll.u32 [#allocation5], 4
      %s224 = int_to_ptr.vmem [resolvable:$true] %s223
      %229 = dma.vmem_to_hbm [thread:$0]  %s224, 4096, %s1, [#allocation4], 128, 128, 8
    $region13: #{tpu_custom_call.1} parent=1 // pred_fallthru
      _
    // Predicated region
    $region14: #{tpu_custom_call.1} parent=1 // pred_check
      _
    $region15: #{tpu_custom_call.1} parent=1 // pred_check_branch
      %231 = sbr.rel (0) target = $region17
    $region16: #{tpu_custom_call.1} parent=1 // pred_region
      %232 = dma.done [#allocation4], 4096
    $region17: #{tpu_custom_call.1} parent=1 // pred_fallthru
      _
    %233 = vsyncpa [#allocation3], 1
    %234 = vsyncpa [#allocation4], 1

// kernel: tpu_custom_call.1
$region0: #{tpu_custom_call.1}
  #allocation0 [shape = 'u32[]', space=smem, size = 0x4, offset = 0x4, fixed_abs, tag = 'smem constant byte address 0x4 - core index']
  #allocation1 [shape = 'u32[144,128]{1,0:T(1,128)}', space=vmem, size = 0x12000, scoped, tag = 'internal scratch']
  %s0 = inlined_call_operand.hbm [shape: s32[2,2,128], index: 0, kind: input, shape index: {}]
  %s1 = inlined_call_operand.hbm [shape: s8[2,4,256], index: 1, kind: input, shape index: {}]
  %s2 = inlined_call_operand.hbm [shape: s8[2,4,128], index: 2, kind: output, shape index: {}]
  %s3 = sld [smem:[#allocation0]]
  $region49: #{tpu_custom_call.1} parent=0
    _
  %s5 = ssub.s32 1, %s3
  %s6 = scalar_select 0, %s5, %s3
  $region1: #{tpu_custom_call.1} parent=0
    #allocation2 [shape = 'u8[2048]{0}', space=vmem, size = 0x800, scoped, tag = 'input window, operand 0']
    #allocation3 [shape = 's32[2]{0}', space=sflag, size = 0x8, scoped, tag = 'scoped memory for tpu_custom_call.1']
    #allocation4 [shape = 's32[2]{0}', space=sflag, size = 0x8, scoped, tag = 'scoped memory for tpu_custom_call.1']
    #allocation5 [shape = 'u8[2048]{0}', space=vmem, size = 0x800, scoped, tag = 'input window, operand 1']
    #allocation6 [shape = 's32[2]{0}', space=sflag, size = 0x8, scoped, tag = 'scoped memory for tpu_custom_call.1']
    #allocation7 [shape = 'u8[1024]{0}', space=vmem, size = 0x400, scoped, tag = 'output window, operand 0']
    %7 = vsyncpa [#allocation3], 0
    %s8 = scalar_lea.sflag [#allocation3], 1
    %9 = vsyncpa %s8, 0
    %10 = vsyncpa [#allocation6], 0
    %s11 = scalar_lea.sflag [#allocation6], 1
    %12 = vsyncpa %s11, 0
    %13 = vsyncpa [#allocation4], 0
    %s14 = scalar_lea.sflag [#allocation4], 1
    %15 = vsyncpa %s14, 0
    loop: start=0, step=1, limit=4
    $region2: #{tpu_custom_call.1} parent=1 // loop_pre_header
      _
    $region3: #{tpu_custom_call.1} parent=1 // loop_header
      %s17 = sphi 0, %s21
      %p18 = scmp.ge.s32.totalorder %s17, 4
      %s24 = sphi 0, %s36
      %s25 = sphi 0, %s32
      %s26 = sphi 0, %s24
      %s27 = sphi 0, %s25
      %s28 = sphi 0, %s26
      %s29 = sphi 0, %s27
      %s41 = sphi 0, %s43
      %s44 = sphi 0, %s41
      %s45 = sphi 0, %s44
      %s61 = sphi 0, %s45
      %s67 = sphi 0, %s69
      %s70 = sphi 0, %s67
      %s71 = sphi 0, %s70
      %s87 = sphi 0, %s71
      %s95 = sphi 0, %s97
      %s98 = sphi 0, %s95
      %s99 = sphi 0, %s98
      %s115 = sphi 0, %s99
    $region4: #{tpu_custom_call.1} parent=1 // loop_header_branch
      %20 = sbr.rel (%p18) target = $region8
    $region5: #{tpu_custom_call.1} parent=1 // loop_body
      %s22 = ssub.s32 %s17, 1
      %s23 = ssub.s32 %s17, 2
      %s30 = sadd.s32 1, %s25
      %p31 = scmp.ge.s32.totalorder %s30, 1
      %s32 = scalar_select %p31, 0, %s30
      %s33 = sadd.s32 1, %s24
      %s34 = scalar_select %p31, %s33, %s24
      %p35 = scmp.ge.s32.totalorder %s34, 2
      %s36 = scalar_select %p35, 0, %s34
      %s37 = ssub.s32 %s24, %s36
      %s38 = ssub.s32 %s25, %s32
      %s39 = sor.u32 %s37, %s38
      %p40 = scmp.eq.s32.totalorder %s39, 0
      %s42 = sadd.s32 %s41, 1
      %s43 = scalar_select %p40, %s41, %s42
      %p46 = pneg %p40
      %p47 = scmp.eq.s32.totalorder %s17, 1
      %p48 = por %p46, %p47
      %p49 = scmp.ne.s32.totalorder %s41, %s44
      %p50 = scmp.eq.s32.totalorder %s17, 0
      %p51 = por %p49, %p50
      %p52 = scmp.ne.s32.totalorder %s41, %s44
      %p53 = scmp.eq.s32.totalorder %s22, 1
      %p54 = por %p52, %p53
      %p55 = scmp.ne.s32.totalorder %s44, %s45
      %p56 = scmp.eq.s32.totalorder %s22, 0
      %p57 = por %p55, %p56
      %p58 = scmp.ne.s32.totalorder %s44, %s45
      %p59 = scmp.eq.s32.totalorder %s23, 1
      %p60 = por %p58, %p59
      %p62 = scmp.ne.s32.totalorder %s45, %s61
      %p63 = scmp.eq.s32.totalorder %s23, 0
      %p64 = por %p62, %p63
      %s65 = ssub.s32 %s24, %s36
      %p66 = scmp.eq.s32.totalorder %s65, 0
      %s68 = sadd.s32 %s67, 1
      %s69 = scalar_select %p66, %s67, %s68
      %p72 = pneg %p66
      %p73 = scmp.eq.s32.totalorder %s17, 1
      %p74 = por %p72, %p73
      %p75 = scmp.ne.s32.totalorder %s67, %s70
      %p76 = scmp.eq.s32.totalorder %s17, 0
      %p77 = por %p75, %p76
      %p78 = scmp.ne.s32.totalorder %s67, %s70
      %p79 = scmp.eq.s32.totalorder %s22, 1
      %p80 = por %p78, %p79
      %p81 = scmp.ne.s32.totalorder %s70, %s71
      %p82 = scmp.eq.s32.totalorder %s22, 0
      %p83 = por %p81, %p82
      %p84 = scmp.ne.s32.totalorder %s70, %s71
      %p85 = scmp.eq.s32.totalorder %s23, 1
      %p86 = por %p84, %p85
      %p88 = scmp.ne.s32.totalorder %s71, %s87
      %p89 = scmp.eq.s32.totalorder %s23, 0
      %p90 = por %p88, %p89
      %s91 = ssub.s32 %s24, %s36
      %s92 = ssub.s32 %s25, %s32
      %s93 = sor.u32 %s91, %s92
      %p94 = scmp.eq.s32.totalorder %s93, 0
      %s96 = sadd.s32 %s95, 1
      %s97 = scalar_select %p94, %s95, %s96
      %p100 = pneg %p94
      %p101 = scmp.eq.s32.totalorder %s17, 1
      %p102 = por %p100, %p101
      %p103 = scmp.ne.s32.totalorder %s95, %s98
      %p104 = scmp.eq.s32.totalorder %s17, 0
      %p105 = por %p103, %p104
      %p106 = scmp.ne.s32.totalorder %s95, %s98
      %p107 = scmp.eq.s32.totalorder %s22, 1
      %p108 = por %p106, %p107
      %p109 = scmp.ne.s32.totalorder %s98, %s99
      %p110 = scmp.eq.s32.totalorder %s22, 0
      %p111 = por %p109, %p110
      %p112 = scmp.ne.s32.totalorder %s98, %s99
      %p113 = scmp.eq.s32.totalorder %s23, 1
      %p114 = por %p112, %p113
      %p116 = scmp.ne.s32.totalorder %s99, %s115
      %p117 = scmp.eq.s32.totalorder %s23, 0
      %p118 = por %p116, %p117
      %p119 = scmp.le.s32.totalorder 1, %s17
      %p120 = scmp.lt.s32.totalorder %s17, 3
      %p121 = pnand %p119, %p120
      %p122 = pneg %p121
      // Predicated region
      $region9: #{tpu_custom_call.1} parent=5 // pred_check
        _
      $region10: #{tpu_custom_call.1} parent=5 // pred_check_branch
        %124 = sbr.rel (%p121) target = $region12
      $region11: #{tpu_custom_call.1} parent=5 // pred_region
        %s125 = ssub.s32 %s17, 1
      $region12: #{tpu_custom_call.1} parent=5 // pred_fallthru
        _
      %p126 = scmp.lt.s32.totalorder %s17, 2
      // Predicated region
      $region13: #{tpu_custom_call.1} parent=5 // pred_check
        %p127 = pneg %p126
      $region14: #{tpu_custom_call.1} parent=5 // pred_check_branch
        %129 = sbr.rel (%p127) target = $region16
      $region15: #{tpu_custom_call.1} parent=5 // pred_region
        // Predicated region
        $region17: #{tpu_custom_call.1} parent=15 // pred_check
          %p130 = pneg %p51
        $region18: #{tpu_custom_call.1} parent=15 // pred_check_branch
          %132 = sbr.rel (%p130) target = $region20
        $region19: #{tpu_custom_call.1} parent=15 // pred_region
          %s133 = sand.u32 %s41, 1
          %s134 = scalar_lea.sflag [#allocation3], %s133
          %s135 = sand.u32 %s41, 1
          %s136 = smul.addr %s135, 2
          %s137 = scalar_lea.vmem [#allocation2], %s136
          %s139 = ssub.s32 32, 32
          %140 = vsyncadd %s134, %s139
          %s141 = sadd.s32 %s25, %s24
          %s142 = smul.addr %s141, 32
          %s143 = scalar_lea.hbm %s0, %s142
          %s145 = sshll.u32 %s137, 4
          %s146 = int_to_ptr.vmem [resolvable:$true] %s145
          %148 = dma.hbm_to_vmem [thread:$0]  %s143, 32, %s146, %s134
        $region20: #{tpu_custom_call.1} parent=15 // pred_fallthru
          _
        // Predicated region
        $region21: #{tpu_custom_call.1} parent=15 // pred_check
          %p149 = pneg %p77
        $region22: #{tpu_custom_call.1} parent=15 // pred_check_branch
          %151 = sbr.rel (%p149) target = $region24
        $region23: #{tpu_custom_call.1} parent=15 // pred_region
          %s152 = sand.u32 %s67, 1
          %s153 = scalar_lea.sflag [#allocation6], %s152
          %s154 = sand.u32 %s67, 1
          %s155 = smul.addr %s154, 2
          %s156 = scalar_lea.vmem [#allocation5], %s155
          %s158 = ssub.s32 32, 32
          %159 = vsyncadd %s153, %s158
          %s160 = smul.addr %s24, 2
          %s161 = smul.addr %s160, 16
          %s162 = scalar_lea.hbm %s1, %s161
          %s164 = sshll.u32 %s156, 4
          %s165 = int_to_ptr.vmem [resolvable:$true] %s164
          %167 = dma.hbm_to_vmem [thread:$0]  %s162, 32, %s165, %s153
        $region24: #{tpu_custom_call.1} parent=15 // pred_fallthru
          _
      $region16: #{tpu_custom_call.1} parent=5 // pred_fallthru
        _
      %p168 = scmp.le.s32.totalorder 1, %s17
      %p169 = scmp.lt.s32.totalorder %s17, 3
      %p170 = pnand %p168, %p169
      %p171 = pneg %p170
      // Predicated region
      $region25: #{tpu_custom_call.1} parent=5 // pred_check
        _
      $region26: #{tpu_custom_call.1} parent=5 // pred_check_branch
        %173 = sbr.rel (%p170) target = $region28
      $region27: #{tpu_custom_call.1} parent=5 // pred_region
        %s174 = ssub.s32 %s17, 1
        %s175 = sand.u32 %s44, 1
        %s176 = scalar_lea.sflag [#allocation3], %s175
        %s177 = sand.u32 %s44, 1
        %s178 = smul.addr %s177, 2
        %s179 = scalar_lea.vmem [#allocation2], %s178
        // Predicated region
        $region29: #{tpu_custom_call.1} parent=27 // pred_check
          %p180 = pneg %p57
        $region30: #{tpu_custom_call.1} parent=27 // pred_check_branch
          %182 = sbr.rel (%p180) target = $region32
        $region31: #{tpu_custom_call.1} parent=27 // pred_region
          %183 = dma.done %s176, 32
        $region32: #{tpu_custom_call.1} parent=27 // pred_fallthru
          _
        %s184 = sand.u32 %s70, 1
        %s185 = scalar_lea.sflag [#allocation6], %s184
        %s186 = sand.u32 %s70, 1
        %s187 = smul.addr %s186, 2
        %s188 = scalar_lea.vmem [#allocation5], %s187
        // Predicated region
        $region33: #{tpu_custom_call.1} parent=27 // pred_check
          %p189 = pneg %p83
        $region34: #{tpu_custom_call.1} parent=27 // pred_check_branch
          %191 = sbr.rel (%p189) target = $region36
        $region35: #{tpu_custom_call.1} parent=27 // pred_region
          %192 = dma.done %s185, 32
        $region36: #{tpu_custom_call.1} parent=27 // pred_fallthru
          _
        %s193 = sand.u32 %s44, 1
        %s194 = scalar_lea.sflag [#allocation3], %s193
        %s195 = sand.u32 %s44, 1
        %s196 = smul.addr %s195, 2
        %s197 = scalar_lea.vmem [#allocation2], %s196
        %p198 = pneg %p57
        %p199 = pneg %p54
        %s200 = sand.u32 %s70, 1
        %s201 = scalar_lea.sflag [#allocation6], %s200
        %s202 = sand.u32 %s70, 1
        %s203 = smul.addr %s202, 2
        %s204 = scalar_lea.vmem [#allocation5], %s203
        %p205 = pneg %p83
        %p206 = pneg %p80
        %p207 = pneg %p111
        %p208 = pneg %p108
        %s209 = sand.u32 %s98, 1
        %s210 = scalar_lea.sflag [#allocation4], %s209
        %s211 = sand.u32 %s98, 1
        %s212 = scalar_lea.vmem [#allocation7], %s211
        %v214 = vld [vmem:[%s179] sm:$0x3]
        %v215 = vcvt.s32.f32 %v214
        %v216 = vmul.f32 %v215, 0.05
        %s217 = smul.u32 %s27, 128
        %v218 = vlaneseq
        %v219 = vand.u32 %v218, 127
        %v220 = vstv %s217
        %v221 = vadd.s32 %v220, %v219
        %v222 = vcvt.s32.f32 %v221
        %v223 = vadd.f32 %v222, 0.5
        %v224 = vrcp.pop 8.0
        %v225 = vmul.f32 %v223, %v224
        %v226 = vfloor.f32 %v225
        %v227 = vmul.f32 %v226, 8.0
        %v228 = vsub.f32 %v222, %v227
        %v229 = vadd.f32 %v228, %v216
        %v230 = vadd.f32 %v226, %v216
        %v231 = vfloor.f32 %v229
        %v232 = vfloor.f32 %v230
        %v233 = vsub.f32 %v229, %v231
        %v234 = vsub.f32 %v230, %v232
        %v235 = vcvt.f32.s32.to.zero.pseudo %v231
        %v236 = vcvt.f32.s32.to.zero.pseudo %v232
        %v237 = vsub.f32 1.0, %v233
        %v238 = vsub.f32 1.0, %v234
        %v240 = vrot.slane %v238, 1
        %v242 = vmul.f32 %v237, %v240
        %vm243 = vcmp.ge.s32.totalorder %v235, 0
        %vm244 = vcmp.lt.s32.totalorder %v235, 16
        %vm245 = vmand %vm243, %vm244
        %vm246 = vcmp.ge.s32.totalorder %v236, 0
        %v247 = vsel %vm246, 1, 0
        %v248 = vrot.slane %v247, 1
        %vm249 = vcmp.ne.s32.totalorder %v248, 0
        %vm250 = vmand %vm245, %vm249
        %vm251 = vcmp.lt.s32.totalorder %v236, 16
        %v252 = vsel %vm251, 1, 0
        %v253 = vrot.slane %v252, 1
        %vm254 = vcmp.ne.s32.totalorder %v253, 0
        %vm255 = vmand %vm250, %vm254
        %v256 = vsel %vm255, 1, 0
        %v257 = vcvt.s32.f32 %v256
        %v258 = vmul.f32 %v242, %v257
        %v259 = vmul.f32 %v233, %v240
        %v260 = vadd.s32 %v235, 1
        %vm261 = vcmp.ge.s32.totalorder %v260, 0
        %vm262 = vcmp.lt.s32.totalorder %v260, 16
        %vm263 = vmand %vm261, %vm262
        %vm264 = vmand %vm263, %vm249
        %vm265 = vmand %vm264, %vm254
        %v266 = vsel %vm265, 1, 0
        %v267 = vcvt.s32.f32 %v266
        %v268 = vmul.f32 %v259, %v267
        %v270 = vrot.slane %v234, 1
        %v272 = vmul.f32 %v237, %v270
        %v273 = vadd.s32 %v236, 1
        %vm274 = vcmp.ge.s32.totalorder %v273, 0
        %v275 = vsel %vm274, 1, 0
        %v276 = vrot.slane %v275, 1
        %vm277 = vcmp.ne.s32.totalorder %v276, 0
        %vm278 = vmand %vm245, %vm277
        %vm279 = vcmp.lt.s32.totalorder %v273, 16
        %v280 = vsel %vm279, 1, 0
        %v281 = vrot.slane %v280, 1
        %vm282 = vcmp.ne.s32.totalorder %v281, 0
        %vm283 = vmand %vm278, %vm282
        %v284 = vsel %vm283, 1, 0
        %v285 = vcvt.s32.f32 %v284
        %v286 = vmul.f32 %v272, %v285
        %v287 = vmul.f32 %v233, %v270
        %vm288 = vmand %vm263, %vm277
        %vm289 = vmand %vm288, %vm282
        %v290 = vsel %vm289, 1, 0
        %v291 = vcvt.s32.f32 %v290
        %v292 = vmul.f32 %v287, %v291
        %v293 = vlaneseq
        %v294 = vshrl.u32 %v293, 7
        %v295 = vadd.s32 %v294, 8
        %v296 = vadd.s32 %v294, 16
        %v297 = vadd.s32 %v294, 24
        %v298 = vadd.s32 %v294, 32
        %v299 = vadd.s32 %v294, 40
        %v300 = vadd.s32 %v294, 48
        %v301 = vadd.s32 %v294, 56
        %v302 = vadd.s32 %v294, 64
        %v303 = vadd.s32 %v294, 72
        %v304 = vadd.s32 %v294, 80
        %v305 = vadd.s32 %v294, 88
        %v306 = vadd.s32 %v294, 96
        %v307 = vadd.s32 %v294, 104
        %v308 = vadd.s32 %v294, 112
        %v309 = vadd.s32 %v294, 120
        %v310 = vadd.s32 %v294, 128
        %v311 = vadd.s32 %v294, 136
        %v312 = vadd.s32 %v294, 144
        %v313 = vadd.s32 %v294, 152
        %v314 = vadd.s32 %v294, 160
        %v315 = vadd.s32 %v294, 168
        %v316 = vadd.s32 %v294, 176
        %v317 = vadd.s32 %v294, 184
        %v318 = vadd.s32 %v294, 192
        %v319 = vadd.s32 %v294, 200
        %v320 = vadd.s32 %v294, 208
        %v321 = vadd.s32 %v294, 216
        %v322 = vadd.s32 %v294, 224
        %v323 = vadd.s32 %v294, 232
        %v324 = vadd.s32 %v294, 240
        %v325 = vadd.s32 %v294, 248
        %v326 = vmul.u32 %v236, 16
        %v327 = vrot.slane %v235, 7
        %v328 = vadd.s32 %v326, %v327
        %v329 = vlaneseq
        %v330 = vshrl.u32 %v329, 7
        %v331 = vsub.s32 1, %v330
        %v332 = vrot.slane %v328, %v331
        %vm333 = vcmp.eq.s32.totalorder %v294, %v332
        %vm334 = vcmp.eq.s32.totalorder %v295, %v332
        %vm335 = vcmp.eq.s32.totalorder %v296, %v332
        %vm336 = vcmp.eq.s32.totalorder %v297, %v332
        %vm337 = vcmp.eq.s32.totalorder %v298, %v332
        %vm338 = vcmp.eq.s32.totalorder %v299, %v332
        %vm339 = vcmp.eq.s32.totalorder %v300, %v332
        %vm340 = vcmp.eq.s32.totalorder %v301, %v332
        %vm341 = vcmp.eq.s32.totalorder %v302, %v332
        %vm342 = vcmp.eq.s32.totalorder %v303, %v332
        %vm343 = vcmp.eq.s32.totalorder %v304, %v332
        %vm344 = vcmp.eq.s32.totalorder %v305, %v332
        %vm345 = vcmp.eq.s32.totalorder %v306, %v332
        %vm346 = vcmp.eq.s32.totalorder %v307, %v332
        %vm347 = vcmp.eq.s32.totalorder %v308, %v332
        %vm348 = vcmp.eq.s32.totalorder %v309, %v332
        %vm349 = vcmp.eq.s32.totalorder %v310, %v332
        %vm350 = vcmp.eq.s32.totalorder %v311, %v332
        %vm351 = vcmp.eq.s32.totalorder %v312, %v332
        %vm352 = vcmp.eq.s32.totalorder %v313, %v332
        %vm353 = vcmp.eq.s32.totalorder %v314, %v332
        %vm354 = vcmp.eq.s32.totalorder %v315, %v332
        %vm355 = vcmp.eq.s32.totalorder %v316, %v332
        %vm356 = vcmp.eq.s32.totalorder %v317, %v332
        %vm357 = vcmp.eq.s32.totalorder %v318, %v332
        %vm358 = vcmp.eq.s32.totalorder %v319, %v332
        %vm359 = vcmp.eq.s32.totalorder %v320, %v332
        %vm360 = vcmp.eq.s32.totalorder %v321, %v332
        %vm361 = vcmp.eq.s32.totalorder %v322, %v332
        %vm362 = vcmp.eq.s32.totalorder %v323, %v332
        %vm363 = vcmp.eq.s32.totalorder %v324, %v332
        %vm364 = vcmp.eq.s32.totalorder %v325, %v332
        %v365 = vlaneseq
        %v366 = vshrl.u32 %v365, 7
        %v367 = vsub.s32 0, %v366
        %v368 = vrot.slane %v258, %v367
        %v369 = vsel %vm333, %v368, 0.0
        %v370 = vsel %vm334, %v368, 0.0
        %v371 = vsel %vm335, %v368, 0.0
        %v372 = vsel %vm336, %v368, 0.0
        %v373 = vsel %vm337, %v368, 0.0
        %v374 = vsel %vm338, %v368, 0.0
        %v375 = vsel %vm339, %v368, 0.0
        %v376 = vsel %vm340, %v368, 0.0
        %v377 = vsel %vm341, %v368, 0.0
        %v378 = vsel %vm342, %v368, 0.0
        %v379 = vsel %vm343, %v368, 0.0
        %v380 = vsel %vm344, %v368, 0.0
        %v381 = vsel %vm345, %v368, 0.0
        %v382 = vsel %vm346, %v368, 0.0
        %v383 = vsel %vm347, %v368, 0.0
        %v384 = vsel %vm348, %v368, 0.0
        %v385 = vsel %vm349, %v368, 0.0
        %v386 = vsel %vm350, %v368, 0.0
        %v387 = vsel %vm351, %v368, 0.0
        %v388 = vsel %vm352, %v368, 0.0
        %v389 = vsel %vm353, %v368, 0.0
        %v390 = vsel %vm354, %v368, 0.0
        %v391 = vsel %vm355, %v368, 0.0
        %v392 = vsel %vm356, %v368, 0.0
        %v393 = vsel %vm357, %v368, 0.0
        %v394 = vsel %vm358, %v368, 0.0
        %v395 = vsel %vm359, %v368, 0.0
        %v396 = vsel %vm360, %v368, 0.0
        %v397 = vsel %vm361, %v368, 0.0
        %v398 = vsel %vm362, %v368, 0.0
        %v399 = vsel %vm363, %v368, 0.0
        %v400 = vsel %vm364, %v368, 0.0
        %v401 = vadd.s32 %v328, 1
        %v402 = vlaneseq
        %v403 = vshrl.u32 %v402, 7
        %v404 = vsub.s32 1, %v403
        %v405 = vrot.slane %v401, %v404
        %vm406 = vcmp.eq.s32.totalorder %v294, %v405
        %vm407 = vcmp.eq.s32.totalorder %v295, %v405
        %vm408 = vcmp.eq.s32.totalorder %v296, %v405
        %vm409 = vcmp.eq.s32.totalorder %v297, %v405
        %vm410 = vcmp.eq.s32.totalorder %v298, %v405
        %vm411 = vcmp.eq.s32.totalorder %v299, %v405
        %vm412 = vcmp.eq.s32.totalorder %v300, %v405
        %vm413 = vcmp.eq.s32.totalorder %v301, %v405
        %vm414 = vcmp.eq.s32.totalorder %v302, %v405
        %vm415 = vcmp.eq.s32.totalorder %v303, %v405
        %vm416 = vcmp.eq.s32.totalorder %v304, %v405
        %vm417 = vcmp.eq.s32.totalorder %v305, %v405
        %vm418 = vcmp.eq.s32.totalorder %v306, %v405
        %vm419 = vcmp.eq.s32.totalorder %v307, %v405
        %vm420 = vcmp.eq.s32.totalorder %v308, %v405
        %vm421 = vcmp.eq.s32.totalorder %v309, %v405
        %vm422 = vcmp.eq.s32.totalorder %v310, %v405
        %vm423 = vcmp.eq.s32.totalorder %v311, %v405
        %vm424 = vcmp.eq.s32.totalorder %v312, %v405
        %vm425 = vcmp.eq.s32.totalorder %v313, %v405
        %vm426 = vcmp.eq.s32.totalorder %v314, %v405
        %vm427 = vcmp.eq.s32.totalorder %v315, %v405
        %vm428 = vcmp.eq.s32.totalorder %v316, %v405
        %vm429 = vcmp.eq.s32.totalorder %v317, %v405
        %vm430 = vcmp.eq.s32.totalorder %v318, %v405
        %vm431 = vcmp.eq.s32.totalorder %v319, %v405
        %vm432 = vcmp.eq.s32.totalorder %v320, %v405
        %vm433 = vcmp.eq.s32.totalorder %v321, %v405
        %vm434 = vcmp.eq.s32.totalorder %v322, %v405
        %vm435 = vcmp.eq.s32.totalorder %v323, %v405
        %vm436 = vcmp.eq.s32.totalorder %v324, %v405
        %vm437 = vcmp.eq.s32.totalorder %v325, %v405
        %v438 = vlaneseq
        %v439 = vshrl.u32 %v438, 7
        %v440 = vsub.s32 0, %v439
        %v441 = vrot.slane %v268, %v440
        %v442 = vsel %vm406, %v441, 0.0
        %v443 = vsel %vm407, %v441, 0.0
        %v444 = vsel %vm408, %v441, 0.0
        %v445 = vsel %vm409, %v441, 0.0
        %v446 = vsel %vm410, %v441, 0.0
        %v447 = vsel %vm411, %v441, 0.0
        %v448 = vsel %vm412, %v441, 0.0
        %v449 = vsel %vm413, %v441, 0.0
        %v450 = vsel %vm414, %v441, 0.0
        %v451 = vsel %vm415, %v441, 0.0
        %v452 = vsel %vm416, %v441, 0.0
        %v453 = vsel %vm417, %v441, 0.0
        %v454 = vsel %vm418, %v441, 0.0
        %v455 = vsel %vm419, %v441, 0.0
        %v456 = vsel %vm420, %v441, 0.0
        %v457 = vsel %vm421, %v441, 0.0
        %v458 = vsel %vm422, %v441, 0.0
        %v459 = vsel %vm423, %v441, 0.0
        %v460 = vsel %vm424, %v441, 0.0
        %v461 = vsel %vm425, %v441, 0.0
        %v462 = vsel %vm426, %v441, 0.0
        %v463 = vsel %vm427, %v441, 0.0
        %v464 = vsel %vm428, %v441, 0.0
        %v465 = vsel %vm429, %v441, 0.0
        %v466 = vsel %vm430, %v441, 0.0
        %v467 = vsel %vm431, %v441, 0.0
        %v468 = vsel %vm432, %v441, 0.0
        %v469 = vsel %vm433, %v441, 0.0
        %v470 = vsel %vm434, %v441, 0.0
        %v471 = vsel %vm435, %v441, 0.0
        %v472 = vsel %vm436, %v441, 0.0
        %v473 = vsel %vm437, %v441, 0.0
        %v474 = vadd.f32 %v369, %v442
        %v475 = vadd.f32 %v370, %v443
        %v476 = vadd.f32 %v371, %v444
        %v477 = vadd.f32 %v372, %v445
        %v478 = vadd.f32 %v373, %v446
        %v479 = vadd.f32 %v374, %v447
        %v480 = vadd.f32 %v375, %v448
        %v481 = vadd.f32 %v376, %v449
        %v482 = vadd.f32 %v377, %v450
        %v483 = vadd.f32 %v378, %v451
        %v484 = vadd.f32 %v379, %v452
        %v485 = vadd.f32 %v380, %v453
        %v486 = vadd.f32 %v381, %v454
        %v487 = vadd.f32 %v382, %v455
        %v488 = vadd.f32 %v383, %v456
        %v489 = vadd.f32 %v384, %v457
        %v490 = vadd.f32 %v385, %v458
        %v491 = vadd.f32 %v386, %v459
        %v492 = vadd.f32 %v387, %v460
        %v493 = vadd.f32 %v388, %v461
        %v494 = vadd.f32 %v389, %v462
        %v495 = vadd.f32 %v390, %v463
        %v496 = vadd.f32 %v391, %v464
        %v497 = vadd.f32 %v392, %v465
        %v498 = vadd.f32 %v393, %v466
        %v499 = vadd.f32 %v394, %v467
        %v500 = vadd.f32 %v395, %v468
        %v501 = vadd.f32 %v396, %v469
        %v502 = vadd.f32 %v397, %v470
        %v503 = vadd.f32 %v398, %v471
        %v504 = vadd.f32 %v399, %v472
        %v505 = vadd.f32 %v400, %v473
        %v506 = vadd.s32 %v328, 16
        %v507 = vlaneseq
        %v508 = vshrl.u32 %v507, 7
        %v509 = vsub.s32 1, %v508
        %v510 = vrot.slane %v506, %v509
        %vm511 = vcmp.eq.s32.totalorder %v294, %v510
        %vm512 = vcmp.eq.s32.totalorder %v295, %v510
        %vm513 = vcmp.eq.s32.totalorder %v296, %v510
        %vm514 = vcmp.eq.s32.totalorder %v297, %v510
        %vm515 = vcmp.eq.s32.totalorder %v298, %v510
        %vm516 = vcmp.eq.s32.totalorder %v299, %v510
        %vm517 = vcmp.eq.s32.totalorder %v300, %v510
        %vm518 = vcmp.eq.s32.totalorder %v301, %v510
        %vm519 = vcmp.eq.s32.totalorder %v302, %v510
        %vm520 = vcmp.eq.s32.totalorder %v303, %v510
        %vm521 = vcmp.eq.s32.totalorder %v304, %v510
        %vm522 = vcmp.eq.s32.totalorder %v305, %v510
        %vm523 = vcmp.eq.s32.totalorder %v306, %v510
        %vm524 = vcmp.eq.s32.totalorder %v307, %v510
        %vm525 = vcmp.eq.s32.totalorder %v308, %v510
        %vm526 = vcmp.eq.s32.totalorder %v309, %v510
        %vm527 = vcmp.eq.s32.totalorder %v310, %v510
        %vm528 = vcmp.eq.s32.totalorder %v311, %v510
        %vm529 = vcmp.eq.s32.totalorder %v312, %v510
        %vm530 = vcmp.eq.s32.totalorder %v313, %v510
        %vm531 = vcmp.eq.s32.totalorder %v314, %v510
        %vm532 = vcmp.eq.s32.totalorder %v315, %v510
        %vm533 = vcmp.eq.s32.totalorder %v316, %v510
        %vm534 = vcmp.eq.s32.totalorder %v317, %v510
        %vm535 = vcmp.eq.s32.totalorder %v318, %v510
        %vm536 = vcmp.eq.s32.totalorder %v319, %v510
        %vm537 = vcmp.eq.s32.totalorder %v320, %v510
        %vm538 = vcmp.eq.s32.totalorder %v321, %v510
        %vm539 = vcmp.eq.s32.totalorder %v322, %v510
        %vm540 = vcmp.eq.s32.totalorder %v323, %v510
        %vm541 = vcmp.eq.s32.totalorder %v324, %v510
        %vm542 = vcmp.eq.s32.totalorder %v325, %v510
        %v543 = vlaneseq
        %v544 = vshrl.u32 %v543, 7
        %v545 = vsub.s32 0, %v544
        %v546 = vrot.slane %v286, %v545
        %v547 = vsel %vm511, %v546, 0.0
        %v548 = vsel %vm512, %v546, 0.0
        %v549 = vsel %vm513, %v546, 0.0
        %v550 = vsel %vm514, %v546, 0.0
        %v551 = vsel %vm515, %v546, 0.0
        %v552 = vsel %vm516, %v546, 0.0
        %v553 = vsel %vm517, %v546, 0.0
        %v554 = vsel %vm518, %v546, 0.0
        %v555 = vsel %vm519, %v546, 0.0
        %v556 = vsel %vm520, %v546, 0.0
        %v557 = vsel %vm521, %v546, 0.0
        %v558 = vsel %vm522, %v546, 0.0
        %v559 = vsel %vm523, %v546, 0.0
        %v560 = vsel %vm524, %v546, 0.0
        %v561 = vsel %vm525, %v546, 0.0
        %v562 = vsel %vm526, %v546, 0.0
        %v563 = vsel %vm527, %v546, 0.0
        %v564 = vsel %vm528, %v546, 0.0
        %v565 = vsel %vm529, %v546, 0.0
        %v566 = vsel %vm530, %v546, 0.0
        %v567 = vsel %vm531, %v546, 0.0
        %v568 = vsel %vm532, %v546, 0.0
        %v569 = vsel %vm533, %v546, 0.0
        %v570 = vsel %vm534, %v546, 0.0
        %v571 = vsel %vm535, %v546, 0.0
        %v572 = vsel %vm536, %v546, 0.0
        %v573 = vsel %vm537, %v546, 0.0
        %v574 = vsel %vm538, %v546, 0.0
        %v575 = vsel %vm539, %v546, 0.0
        %v576 = vsel %vm540, %v546, 0.0
        %v577 = vsel %vm541, %v546, 0.0
        %v578 = vsel %vm542, %v546, 0.0
        %v579 = vadd.f32 %v474, %v547
        %v580 = vadd.f32 %v475, %v548
        %v581 = vadd.f32 %v476, %v549
        %v582 = vadd.f32 %v477, %v550
        %v583 = vadd.f32 %v478, %v551
        %v584 = vadd.f32 %v479, %v552
        %v585 = vadd.f32 %v480, %v553
        %v586 = vadd.f32 %v481, %v554
        %v587 = vadd.f32 %v482, %v555
        %v588 = vadd.f32 %v483, %v556
        %v589 = vadd.f32 %v484, %v557
        %v590 = vadd.f32 %v485, %v558
        %v591 = vadd.f32 %v486, %v559
        %v592 = vadd.f32 %v487, %v560
        %v593 = vadd.f32 %v488, %v561
        %v594 = vadd.f32 %v489, %v562
        %v595 = vadd.f32 %v490, %v563
        %v596 = vadd.f32 %v491, %v564
        %v597 = vadd.f32 %v492, %v565
        %v598 = vadd.f32 %v493, %v566
        %v599 = vadd.f32 %v494, %v567
        %v600 = vadd.f32 %v495, %v568
        %v601 = vadd.f32 %v496, %v569
        %v602 = vadd.f32 %v497, %v570
        %v603 = vadd.f32 %v498, %v571
        %v604 = vadd.f32 %v499, %v572
        %v605 = vadd.f32 %v500, %v573
        %v606 = vadd.f32 %v501, %v574
        %v607 = vadd.f32 %v502, %v575
        %v608 = vadd.f32 %v503, %v576
        %v609 = vadd.f32 %v504, %v577
        %v610 = vadd.f32 %v505, %v578
        %v611 = vadd.s32 %v506, 1
        %v612 = vlaneseq
        %v613 = vshrl.u32 %v612, 7
        %v614 = vsub.s32 1, %v613
        %v615 = vrot.slane %v611, %v614
        %vm616 = vcmp.eq.s32.totalorder %v294, %v615
        %vm617 = vcmp.eq.s32.totalorder %v295, %v615
        %vm618 = vcmp.eq.s32.totalorder %v296, %v615
        %vm619 = vcmp.eq.s32.totalorder %v297, %v615
        %vm620 = vcmp.eq.s32.totalorder %v298, %v615
        %vm621 = vcmp.eq.s32.totalorder %v299, %v615
        %vm622 = vcmp.eq.s32.totalorder %v300, %v615
        %vm623 = vcmp.eq.s32.totalorder %v301, %v615
        %vm624 = vcmp.eq.s32.totalorder %v302, %v615
        %vm625 = vcmp.eq.s32.totalorder %v303, %v615
        %vm626 = vcmp.eq.s32.totalorder %v304, %v615
        %vm627 = vcmp.eq.s32.totalorder %v305, %v615
        %vm628 = vcmp.eq.s32.totalorder %v306, %v615
        %vm629 = vcmp.eq.s32.totalorder %v307, %v615
        %vm630 = vcmp.eq.s32.totalorder %v308, %v615
        %vm631 = vcmp.eq.s32.totalorder %v309, %v615
        %vm632 = vcmp.eq.s32.totalorder %v310, %v615
        %vm633 = vcmp.eq.s32.totalorder %v311, %v615
        %vm634 = vcmp.eq.s32.totalorder %v312, %v615
        %vm635 = vcmp.eq.s32.totalorder %v313, %v615
        %vm636 = vcmp.eq.s32.totalorder %v314, %v615
        %vm637 = vcmp.eq.s32.totalorder %v315, %v615
        %vm638 = vcmp.eq.s32.totalorder %v316, %v615
        %vm639 = vcmp.eq.s32.totalorder %v317, %v615
        %vm640 = vcmp.eq.s32.totalorder %v318, %v615
        %vm641 = vcmp.eq.s32.totalorder %v319, %v615
        %vm642 = vcmp.eq.s32.totalorder %v320, %v615
        %vm643 = vcmp.eq.s32.totalorder %v321, %v615
        %vm644 = vcmp.eq.s32.totalorder %v322, %v615
        %vm645 = vcmp.eq.s32.totalorder %v323, %v615
        %vm646 = vcmp.eq.s32.totalorder %v324, %v615
        %vm647 = vcmp.eq.s32.totalorder %v325, %v615
        %v648 = vlaneseq
        %v649 = vshrl.u32 %v648, 7
        %v650 = vsub.s32 0, %v649
        %v651 = vrot.slane %v292, %v650
        %v652 = vsel %vm616, %v651, 0.0
        %v653 = vsel %vm617, %v651, 0.0
        %v654 = vsel %vm618, %v651, 0.0
        %v655 = vsel %vm619, %v651, 0.0
        %v656 = vsel %vm620, %v651, 0.0
        %v657 = vsel %vm621, %v651, 0.0
        %v658 = vsel %vm622, %v651, 0.0
        %v659 = vsel %vm623, %v651, 0.0
        %v660 = vsel %vm624, %v651, 0.0
        %v661 = vsel %vm625, %v651, 0.0
        %v662 = vsel %vm626, %v651, 0.0
        %v663 = vsel %vm627, %v651, 0.0
        %v664 = vsel %vm628, %v651, 0.0
        %v665 = vsel %vm629, %v651, 0.0
        %v666 = vsel %vm630, %v651, 0.0
        %v667 = vsel %vm631, %v651, 0.0
        %v668 = vsel %vm632, %v651, 0.0
        %v669 = vsel %vm633, %v651, 0.0
        %v670 = vsel %vm634, %v651, 0.0
        %v671 = vsel %vm635, %v651, 0.0
        %v672 = vsel %vm636, %v651, 0.0
        %v673 = vsel %vm637, %v651, 0.0
        %v674 = vsel %vm638, %v651, 0.0
        %v675 = vsel %vm639, %v651, 0.0
        %v676 = vsel %vm640, %v651, 0.0
        %v677 = vsel %vm641, %v651, 0.0
        %v678 = vsel %vm642, %v651, 0.0
        %v679 = vsel %vm643, %v651, 0.0
        %v680 = vsel %vm644, %v651, 0.0
        %v681 = vsel %vm645, %v651, 0.0
        %v682 = vsel %vm646, %v651, 0.0
        %v683 = vsel %vm647, %v651, 0.0
        %v684 = vadd.f32 %v579, %v652
        %v685 = vadd.f32 %v580, %v653
        %v686 = vadd.f32 %v581, %v654
        %v687 = vadd.f32 %v582, %v655
        %v688 = vadd.f32 %v583, %v656
        %v689 = vadd.f32 %v584, %v657
        %v690 = vadd.f32 %v585, %v658
        %v691 = vadd.f32 %v586, %v659
        %v692 = vadd.f32 %v587, %v660
        %v693 = vadd.f32 %v588, %v661
        %v694 = vadd.f32 %v589, %v662
        %v695 = vadd.f32 %v590, %v663
        %v696 = vadd.f32 %v591, %v664
        %v697 = vadd.f32 %v592, %v665
        %v698 = vadd.f32 %v593, %v666
        %v699 = vadd.f32 %v594, %v667
        %v700 = vadd.f32 %v595, %v668
        %v701 = vadd.f32 %v596, %v669
        %v702 = vadd.f32 %v597, %v670
        %v703 = vadd.f32 %v598, %v671
        %v704 = vadd.f32 %v599, %v672
        %v705 = vadd.f32 %v600, %v673
        %v706 = vadd.f32 %v601, %v674
        %v707 = vadd.f32 %v602, %v675
        %v708 = vadd.f32 %v603, %v676
        %v709 = vadd.f32 %v604, %v677
        %v710 = vadd.f32 %v605, %v678
        %v711 = vadd.f32 %v606, %v679
        %v712 = vadd.f32 %v607, %v680
        %v713 = vadd.f32 %v608, %v681
        %v714 = vadd.f32 %v609, %v682
        %v715 = vadd.f32 %v610, %v683
        %v716 = vld [vmem:[%s188] sm:$0x3]
        %v718 = vunpack.c.l.s4 1935823168
        %v719 = vunpack.c.0.s8 %v718
        %v720 = vlaneseq
        %v721 = vshrl.u32 %v720, 7
        %v722 = vsub.s32 %v719, %v721
        %v723 = vrot.slane %v716, %v722
        %v724 = vunpack.c.l.s8.bf16 %v723
        %v725 = vpack.c.bf16 %v685, %v684
        %v726 = vpack.c.bf16 %v687, %v686
        %v727 = vpack.c.bf16 %v689, %v688
        %v728 = vpack.c.bf16 %v691, %v690
        %v729 = vpack.c.bf16 %v693, %v692
        %v730 = vpack.c.bf16 %v695, %v694
        %v731 = vpack.c.bf16 %v697, %v696
        %v732 = vpack.c.bf16 %v699, %v698
        %v733 = vpack.c.bf16 %v701, %v700
        %v734 = vpack.c.bf16 %v703, %v702
        %v735 = vpack.c.bf16 %v705, %v704
        %v736 = vpack.c.bf16 %v707, %v706
        %v737 = vpack.c.bf16 %v709, %v708
        %v738 = vpack.c.bf16 %v711, %v710
        %v739 = vpack.c.bf16 %v713, %v712
        %v740 = vpack.c.bf16 %v715, %v714
        %v742 = vunpack.c.l.b16 %v724
        %v743 = vunpack.c.h.b16 %v724
        %v744 = vpack.c.b16 %v742, %v742
        %v745 = vpack.c.b16 %v743, %v743
        %748 = vmatprep.subr.bf16.mxu0 0
        %749 = vmatpush1.bf16.msra.mxu0 %v725
        %750 = vmatprep.subr.bf16.mxu0 0
        %751 = vmatpush1.bf16.msra.mxu0 %v726
        %752 = vmatprep.subr.bf16.mxu0 0
        %753 = vmatpush1.bf16.msra.mxu0 %v727
        %754 = vmatprep.subr.bf16.mxu0 0
        %755 = vmatpush1.bf16.msra.mxu0 %v728
        %756 = vmatprep.subr.bf16.mxu0 0
        %757 = vmatpush1.bf16.msra.mxu0 %v729
        %758 = vmatprep.subr.bf16.mxu0 0
        %759 = vmatpush1.bf16.msra.mxu0 %v730
        %760 = vmatprep.subr.bf16.mxu0 0
        %761 = vmatpush1.bf16.msra.mxu0 %v731
        %762 = vmatprep.subr.bf16.mxu0 0
        %763 = vmatpush1.bf16.msra.mxu0 %v732
        %764 = vmatprep.subr.bf16.mxu0 0
        %765 = vmatpush1.bf16.msra.mxu0 %v733
        %766 = vmatprep.subr.bf16.mxu0 0
        %767 = vmatpush1.bf16.msra.mxu0 %v734
        %768 = vmatprep.subr.bf16.mxu0 0
        %769 = vmatpush1.bf16.msra.mxu0 %v735
        %770 = vmatprep.subr.bf16.mxu0 0
        %771 = vmatpush1.bf16.msra.mxu0 %v736
        %772 = vmatprep.subr.bf16.mxu0 0
        %773 = vmatpush1.bf16.msra.mxu0 %v737
        %774 = vmatprep.subr.bf16.mxu0 0
        %775 = vmatpush1.bf16.msra.mxu0 %v738
        %776 = vmatprep.subr.bf16.mxu0 0
        %777 = vmatpush1.bf16.msra.mxu0 %v739
        %778 = vmatprep.subr.bf16.mxu0 0
        %779 = vmatpush1.bf16.msra.mxu0 %v740
        %780 = vmatprep.mubr.bf16.mxu0 %v745
        %781 = vmatmul.mubr.bf16.gmra.mrb[0].mxu0 %v744
        %v782 = vpop.f32.mrb[0].mxu0
        %v783 = vadd.f32 0.5, %v782
        %v784 = vpop.f32.mrb[0].mxu0
        %v785 = vpop.f32.mrb[0].mxu0
        %v786 = vpop.f32.mrb[0].mxu0
        %787 = vdwg.mxu0
        %v788 = vfloor.f32 %v783
        %v789 = vmax.f32 %v788, -128.0
        %v790 = vmin.f32 %v789, 127.0
        %v791 = vtrunc.f32 %v790
        %v792 = vpack.c.f32.eXmY %v791, %v791, 312
        %v796 = vpack.c.b8 %v792, %v792
        %798 = vst [vmem:[%s212] sm:$0x1] %v796
        %s799 = sand.u32 %s98, 1
        %s800 = scalar_lea.sflag [#allocation4], %s799
        %s801 = sand.u32 %s98, 1
        %s802 = scalar_lea.vmem [#allocation7], %s801
        // Predicated region
        $region37: #{tpu_custom_call.1} parent=27 // pred_check
          %p803 = pneg %p108
        $region38: #{tpu_custom_call.1} parent=27 // pred_check_branch
          %805 = sbr.rel (%p803) target = $region40
        $region39: #{tpu_custom_call.1} parent=27 // pred_region
          %s807 = ssub.s32 16, 16
          %808 = vsyncadd %s800, %s807
          %s809 = sadd.s32 %s27, %s26
          %s810 = smul.addr %s809, 16
          %s811 = scalar_lea.hbm %s2, %s810
          %s813 = sshll.u32 %s802, 4
          %s814 = int_to_ptr.vmem [resolvable:$true] %s813
          %816 = dma.vmem_to_hbm [thread:$0]  %s814, 16, %s811, %s800
        $region40: #{tpu_custom_call.1} parent=27 // pred_fallthru
          _
      $region28: #{tpu_custom_call.1} parent=5 // pred_fallthru
        _
      %p817 = scmp.le.s32.totalorder 2, %s17
      // Predicated region
      $region41: #{tpu_custom_call.1} parent=5 // pred_check
        %p818 = pneg %p817
      $region42: #{tpu_custom_call.1} parent=5 // pred_check_branch
        %820 = sbr.rel (%p818) target = $region44
      $region43: #{tpu_custom_call.1} parent=5 // pred_region
        %s821 = ssub.s32 %s17, 2
        // Predicated region
        $region45: #{tpu_custom_call.1} parent=43 // pred_check
          %p822 = pneg %p114
        $region46: #{tpu_custom_call.1} parent=43 // pred_check_branch
          %824 = sbr.rel (%p822) target = $region48
        $region47: #{tpu_custom_call.1} parent=43 // pred_region
          %s825 = sand.u32 %s99, 1
          %s826 = scalar_lea.sflag [#allocation4], %s825
          %s827 = sand.u32 %s99, 1
          %s828 = scalar_lea.vmem [#allocation7], %s827
          %829 = dma.done %s826, 16
        $region48: #{tpu_custom_call.1} parent=43 // pred_fallthru
          _
      $region44: #{tpu_custom_call.1} parent=5 // pred_fallthru
        _
    $region6: #{tpu_custom_call.1} parent=1 // loop_footer
      %s21 = sadd.s32 1, %s17
    $region7: #{tpu_custom_call.1} parent=1 // loop_footer_branch
      %16 = sbr.rel target = $region3
    $region8: #{tpu_custom_call.1} parent=1 // loop_exit
      _
    %830 = vsyncpa [#allocation3], 1
    %s831 = scalar_lea.sflag [#allocation3], 1
    %832 = vsyncpa %s831, 1
    %833 = vsyncpa [#allocation6], 1
    %s834 = scalar_lea.sflag [#allocation6], 1
    %835 = vsyncpa %s834, 1
    %836 = vsyncpa [#allocation4], 1
    %s837 = scalar_lea.sflag [#allocation4], 1
    %838 = vsyncpa %s837, 1

</llo_original>
